<compile_context>
chip_gen: v6e
topology: v6e:2x2x1
jax: 0.10.0
libtpu: 0.0.40
codegen_flags: <defaults>
</compile_context>

<pallas_src>
import functools
import math

import jax
import jax.numpy as jnp
from jax.experimental import pallas as pl
from jax.experimental.pallas import tpu as pltpu


# ------------------------------- helpers ----------------------------------- #

def _round_up(n, m):
    return ((n + m - 1) // m) * m


# ----------------------------- Pallas kernel ------------------------------- #

def _fc_chain_kernel(x_ref, *refs, n_layers):
    """Fused chain: y = ... ReLU(ReLU(x @ W0 + b0) @ W1 + b1) ... @ Wn + bn.

    refs = (w0, b0, w1, b1, ..., w_{n-1}, b_{n-1}, out).
    Weights are bf16 (or f32), biases f32; accumulation is f32 on the MXU.
    Intermediate activations stay on-chip (no HBM round-trip between layers).
    """
    o_ref = refs[-1]
    y = x_ref[...]                       # (TILE_B, D_in_pad), compute dtype
    acc = None
    for j in range(n_layers):
        w = refs[2 * j][...]             # (D_in_pad, D_out_pad)
        b = refs[2 * j + 1][...]         # (1, D_out_pad), f32
        acc = jnp.dot(y, w, preferred_element_type=jnp.float32) + b
        if j < n_layers - 1:
            # ReLU in f32, then back to the MXU compute dtype for next layer.
            y = jnp.maximum(acc, 0.0).astype(w.dtype)
    o_ref[...] = acc.astype(o_ref.dtype)


# --------------------------- params / prepare ------------------------------ #

def init_fc_filler_params(key, ip_length=128, fc_lengths=(2,)):
    """Deterministic PyTorch-style (uniform +-1/sqrt(fan_in)) init.

    Returns PyTorch-layout params: list of (W (D_out, D_in), b (D_out,)).
    """
    params = []
    dims = [ip_length] + list(fc_lengths)
    for j in range(len(fc_lengths)):
        d_in, d_out = dims[j], dims[j + 1]
        key, kw, kb = jax.random.split(key, 3)
        bound = 1.0 / math.sqrt(d_in)
        w = jax.random.uniform(kw, (d_out, d_in), jnp.float32, -bound, bound)
        b = jax.random.uniform(kb, (d_out,), jnp.float32, -bound, bound)
        params.append((w, b))
    return params


def prepare_fc_filler_params(params, ip_length, use_bf16=True):
    """One-time transform (hoisted out of the forward hot path).

    Transpose each weight to (D_in, D_out), zero-pad both dims up to
    multiples of 128 (lane-dense MXU tiles / unmasked stores), reshape bias
    to (1, D_out_pad) in f32, cast weights to bf16 for the MXU.
    Returns list of (w_t_pad, b_pad, d_out_orig).
    """
    compute_dtype = jnp.bfloat16 if use_bf16 else jnp.float32
    prepared = []
    d_in = ip_length
    for (w, b) in params:
        d_out = w.shape[0]
        d_in_pad = _round_up(d_in, 128)
        d_out_pad = _round_up(d_out, 128)
        w_t = jnp.zeros((d_in_pad, d_out_pad), jnp.float32)
        w_t = w_t.at[:d_in, :d_out].set(jnp.transpose(w))
        b_p = jnp.zeros((1, d_out_pad), jnp.float32).at[0, :d_out].set(b)
        prepared.append((w_t.astype(compute_dtype), b_p, d_out))
        d_in = d_out
    return prepared


# -------------------------------- forward ---------------------------------- #

def fc_filler_forward(prepared, x, *, tile_b=512):
    """x: (B, ip_length) f32 -> (B, fc_lengths[-1]) f32."""
    B, D_in = x.shape
    n_layers = len(prepared)
    compute_dtype = prepared[0][0].dtype
    D_in_pad = prepared[0][0].shape[0]
    D_out_pad = prepared[-1][0].shape[1]
    d_out = prepared[-1][2]

    # Batch tile: multiple of 8 (sublane), capped for VMEM (v7x: 64 MiB phys /
    # 32 MiB scoped; 512 rows x 128 lanes x 2 buffers is comfortably inside).
    tb = min(tile_b, _round_up(B, 8))
    B_pad = _round_up(B, tb)

    # Pad + cast activations once in the wrapper (halves HBM traffic in bf16).
    x_c = x.astype(compute_dtype)
    if (B_pad, D_in_pad) != (B, D_in):
        x_c = jnp.zeros((B_pad, D_in_pad), compute_dtype).at[:B, :D_in].set(x_c)

    flat_args = [x_c]
    in_specs = [pl.BlockSpec((tb, D_in_pad), lambda i: (i, 0))]
    flops = 0
    bytes_accessed = x_c.size * x_c.dtype.itemsize
    for (w_t, b, _do) in prepared:
        flat_args += [w_t, b]
        # Weights/bias: constant index_map -> resident across all batch tiles.
        in_specs += [pl.BlockSpec(w_t.shape, lambda i: (0, 0)),
                     pl.BlockSpec(b.shape, lambda i: (0, 0))]
        flops += 2 * B_pad * w_t.shape[0] * w_t.shape[1]
        bytes_accessed += (w_t.size * w_t.dtype.itemsize
                           + b.size * b.dtype.itemsize)
    bytes_accessed += B_pad * D_out_pad * 4  # f32 output

    out = pl.pallas_call(
        functools.partial(_fc_chain_kernel, n_layers=n_layers),
        out_shape=jax.ShapeDtypeStruct((B_pad, D_out_pad), jnp.float32),
        grid=(B_pad // tb,),
        in_specs=in_specs,
        out_specs=pl.BlockSpec((tb, D_out_pad), lambda i: (i, 0)),
        compiler_params=pltpu.CompilerParams(
            dimension_semantics=("parallel",)),
        cost_estimate=pl.CostEstimate(
            flops=flops, transcendentals=0, bytes_accessed=bytes_accessed),
    )(*flat_args)

    return out[:B, :d_out]


# ------------------------------- reference --------------------------------- #

def fc_filler_reference(params, x, use_bf16=True):
    """Pure-JAX reference mirroring the kernel's numerics (Dropout = identity)."""
    n = len(params)
    y = x
    for j, (w, b) in enumerate(params):
        if use_bf16:
            acc = jnp.dot(y.astype(jnp.bfloat16),
                          jnp.transpose(w).astype(jnp.bfloat16),
                          preferred_element_type=jnp.float32) + b
        else:
            acc = y @ w.T + b
        if j != n - 1:
            y = jnp.maximum(acc, 0.0)
        else:
            y = acc
    return y


# --------------------------------- main ------------------------------------ #

if __name__ == "__main__":
    key = jax.random.PRNGKey(0)

    # Config 1: the default module — single Linear(128, 2).
    ip_length = 128
    fc_lengths = [2]
    batch = 8
    key, kx, kp = jax.random.split(key, 3)
    x = jax.random.normal(kx, (batch, ip_length), jnp.float32)
    params = init_fc_filler_params(kp, ip_length, fc_lengths)
    prepared = prepare_fc_filler_params(params, ip_length, use_bf16=True)

    out = fc_filler_forward(prepared, x)
    out = jax.block_until_ready(out)
    ref = fc_filler_reference(params, x, use_bf16=True)
    assert out.shape == (batch, fc_lengths[-1]), out.shape
    assert jnp.allclose(out, ref, atol=1e-3, rtol=1e-3), (
        float(jnp.max(jnp.abs(out - ref))))

    # Config 2: a small multi-layer chain [Dropout, Linear, ReLU, Linear],
    # exercising the fused in-VMEM intermediate path.
    fc_lengths2 = [64, 2]
    batch2 = 16
    key, kx2, kp2 = jax.random.split(key, 3)
    x2 = jax.random.normal(kx2, (batch2, ip_length), jnp.float32)
    params2 = init_fc_filler_params(kp2, ip_length, fc_lengths2)
    prepared2 = prepare_fc_filler_params(params2, ip_length, use_bf16=True)

    out2 = fc_filler_forward(prepared2, x2)
    out2 = jax.block_until_ready(out2)
    ref2 = fc_filler_reference(params2, x2, use_bf16=True)
    assert out2.shape == (batch2, fc_lengths2[-1]), out2.shape
    assert jnp.allclose(out2, ref2, atol=1e-3, rtol=1e-3), (
        float(jnp.max(jnp.abs(out2 - ref2))))

    print("KERNEL_OK")
</pallas_src>

<mosaic_0001>
module attributes {stable_mosaic.version = 11 : i64} {
  func.func @_fc_chain_kernel(%arg0: i32, %arg1: memref<8x128xbf16, #tpu.memory_space<vmem>>, %arg2: memref<128x128xbf16, #tpu.memory_space<vmem>>, %arg3: memref<1x128xf32, #tpu.memory_space<vmem>>, %arg4: memref<8x128xf32, #tpu.memory_space<vmem>>) attributes {dimension_semantics = [#tpu.dimension_semantics<parallel>], iteration_bounds = array<i64: 1>, scalar_prefetch = 0 : i64, scratch_operands = 0 : i64, tpu.core_type = #tpu.core_type<tc>, window_params = [{transform_indices = @transform_0, window_bounds = array<i64: 8, 128>}, {pipeline_mode = #tpu.pipeline_mode<synchronous>, transform_indices = @transform_1, window_bounds = array<i64: 128, 128>}, {pipeline_mode = #tpu.pipeline_mode<synchronous>, transform_indices = @transform_2, window_bounds = array<i64: 1, 128>}, {transform_indices = @transform_3, window_bounds = array<i64: 8, 128>}]} {
    %c0 = arith.constant 0 : index
    %c0_0 = arith.constant 0 : index
    %0 = vector.load %arg1[%c0, %c0_0] : memref<8x128xbf16, #tpu.memory_space<vmem>>, vector<8x128xbf16>
    %c0_1 = arith.constant 0 : index
    %c0_2 = arith.constant 0 : index
    %1 = vector.load %arg2[%c0_1, %c0_2] : memref<128x128xbf16, #tpu.memory_space<vmem>>, vector<128x128xbf16>
    %c0_3 = arith.constant 0 : index
    %c0_4 = arith.constant 0 : index
    %2 = vector.load %arg3[%c0_3, %c0_4] : memref<1x128xf32, #tpu.memory_space<vmem>>, vector<1x128xf32>
    %cst = arith.constant dense<0.000000e+00> : vector<8x128xf32>
    %3 = tpu.matmul %0, %1, %cst {dimension_numbers = #tpu.dot_dimension_numbers<[1], [0], [0], [1], [0, 0, 1, 1], [], []>} : vector<8x128xbf16>, vector<128x128xbf16>, vector<8x128xf32> -> vector<8x128xf32>
    %4 = vector.broadcast %2 : vector<1x128xf32> to vector<8x128xf32>
    %5 = arith.addf %3, %4 : vector<8x128xf32>
    %c0_5 = arith.constant 0 : index
    %c0_6 = arith.constant 0 : index
    %6 = vector.load %arg4[%c0_5, %c0_6] : memref<8x128xf32, #tpu.memory_space<vmem>>, vector<8x128xf32>
    tpu.vector_store %arg4[%c0_5, %c0_6], %5 {strides = array<i32>} : memref<8x128xf32, #tpu.memory_space<vmem>>, vector<8x128xf32>,
    return
  }
  func.func @transform_0(%arg0: i32) -> (i32, i32) {
    %c0_i32 = arith.constant 0 : i32
    %c0_i32_0 = arith.constant 0 : i32
    return %arg0, %c0_i32 : i32, i32
  }
  func.func @transform_1(%arg0: i32) -> (i32, i32) {
    %c0_i32 = arith.constant 0 : i32
    %c0_i32_0 = arith.constant 0 : i32
    %c0_i32_1 = arith.constant 0 : i32
    return %c0_i32, %c0_i32_0 : i32, i32
  }
  func.func @transform_2(%arg0: i32) -> (i32, i32) {
    %c0_i32 = arith.constant 0 : i32
    %c0_i32_0 = arith.constant 0 : i32
    %c0_i32_1 = arith.constant 0 : i32
    return %c0_i32, %c0_i32_0 : i32, i32
  }
  func.func @transform_3(%arg0: i32) -> (i32, i32) {
    %c0_i32 = arith.constant 0 : i32
    %c0_i32_0 = arith.constant 0 : i32
    return %arg0, %c0_i32 : i32, i32
  }
}

</mosaic_0001>

<llo_original>
// kernel: tpu_custom_call.1
$region0: #{tpu_custom_call.1}
  #allocation0 [shape = 'u32[]', space=smem, size = 0x4, offset = 0x4, fixed_abs, tag = 'smem constant byte address 0x4 - core index']
  #allocation1 [shape = 'u32[144,128]{1,0:T(1,128)}', space=vmem, size = 0x12000, scoped, tag = 'internal scratch']
  %s0 = inlined_call_operand.hbm [shape: bf16[8,128], index: 0, kind: input, shape index: {}]
  %s1 = inlined_call_operand.hbm [shape: bf16[128,128], index: 1, kind: input, shape index: {}]
  %s2 = inlined_call_operand.vmem [shape: f32[1,128], index: 2, kind: input, shape index: {}]
  %s3 = inlined_call_operand.hbm [shape: f32[8,128], index: 3, kind: output, shape index: {}]
  %s4 = sld [smem:[#allocation0]]
  $region30: #{tpu_custom_call.1} parent=0
    _
  %s6 = ssub.s32 1, %s4
  %s7 = scalar_select 0, %s6, %s4
  $region1: #{tpu_custom_call.1} parent=0
    #allocation2 [shape = 'u8[2048]{0}', space=vmem, size = 0x800, scoped, tag = 'input window, operand 0, single buffered']
    #allocation3 [shape = 's32[1]{0}', space=sflag, size = 0x4, scoped, tag = 'scoped memory for tpu_custom_call.1']
    #allocation4 [shape = 's32[1]{0}', space=sflag, size = 0x4, scoped, tag = 'scoped memory for tpu_custom_call.1']
    #allocation5 [shape = 'u8[32768]{0}', space=vmem, size = 0x8000, scoped, tag = 'input window, operand 1, single buffered']
    #allocation6 [shape = 's32[1]{0}', space=sflag, size = 0x4, scoped, tag = 'scoped memory for tpu_custom_call.1']
    #allocation7 [shape = 'u8[4096]{0}', space=vmem, size = 0x1000, scoped, tag = 'output window, operand 0, single buffered']
    %8 = vsyncpa [#allocation3], 0
    %9 = vsyncpa [#allocation6], 0
    %10 = vsyncpa [#allocation4], 0
    // Predicated region
    $region2: #{tpu_custom_call.1} parent=1 // pred_check
      _
    $region3: #{tpu_custom_call.1} parent=1 // pred_check_branch
      %12 = sbr.rel (0) target = $region5
    $region4: #{tpu_custom_call.1} parent=1 // pred_region
      %s14 = ssub.s32 64, 64
      %15 = vsyncadd [#allocation3], %s14
      %s17 = sshll.u32 [#allocation2], 4
      %s18 = int_to_ptr.vmem [resolvable:$true] %s17
      %20 = dma.hbm_to_vmem [thread:$0]  %s0, 64, %s18, [#allocation3]
    $region5: #{tpu_custom_call.1} parent=1 // pred_fallthru
      _
    // Predicated region
    $region6: #{tpu_custom_call.1} parent=1 // pred_check
      _
    $region7: #{tpu_custom_call.1} parent=1 // pred_check_branch
      %22 = sbr.rel (0) target = $region9
    $region8: #{tpu_custom_call.1} parent=1 // pred_region
      %s24 = ssub.s32 1024, 1024
      %25 = vsyncadd [#allocation6], %s24
      %s26 = sshll.u32 [#allocation5], 4
      %s27 = int_to_ptr.vmem [resolvable:$true] %s26
      %32 = dma.hbm_to_vmem [thread:$0]  %s1, 1024, %s27, [#allocation6], 64, 64, 4
    $region9: #{tpu_custom_call.1} parent=1 // pred_fallthru
      _
    // Predicated region
    $region10: #{tpu_custom_call.1} parent=1 // pred_check
      _
    $region11: #{tpu_custom_call.1} parent=1 // pred_check_branch
      %34 = sbr.rel (0) target = $region13
    $region12: #{tpu_custom_call.1} parent=1 // pred_region
      _
    $region13: #{tpu_custom_call.1} parent=1 // pred_fallthru
      _
    // Predicated region
    $region14: #{tpu_custom_call.1} parent=1 // pred_check
      _
    $region15: #{tpu_custom_call.1} parent=1 // pred_check_branch
      %36 = sbr.rel (0) target = $region17
    $region16: #{tpu_custom_call.1} parent=1 // pred_region
      %37 = dma.done [#allocation3], 64
    $region17: #{tpu_custom_call.1} parent=1 // pred_fallthru
      _
    // Predicated region
    $region18: #{tpu_custom_call.1} parent=1 // pred_check
      _
    $region19: #{tpu_custom_call.1} parent=1 // pred_check_branch
      %39 = sbr.rel (0) target = $region21
    $region20: #{tpu_custom_call.1} parent=1 // pred_region
      %40 = dma.done [#allocation6], 1024
    $region21: #{tpu_custom_call.1} parent=1 // pred_fallthru
      _
    %v42 = vld [vmem:[#allocation2] sm:$0xf]
    %v43 = vld [vmem:[#allocation5] sm:$0xf]
    %v44 = vld [vmem:[#allocation5 + $0x4] sm:$0xf]
    %v45 = vld [vmem:[#allocation5 + $0x8] sm:$0xf]
    %v46 = vld [vmem:[#allocation5 + $0xc] sm:$0xf]
    %v47 = vld [vmem:[#allocation5 + $0x10] sm:$0xf]
    %v48 = vld [vmem:[#allocation5 + $0x14] sm:$0xf]
    %v49 = vld [vmem:[#allocation5 + $0x18] sm:$0xf]
    %v50 = vld [vmem:[#allocation5 + $0x1c] sm:$0xf]
    %v51 = vld [vmem:[#allocation5 + $0x20] sm:$0xf]
    %v52 = vld [vmem:[#allocation5 + $0x24] sm:$0xf]
    %v53 = vld [vmem:[#allocation5 + $0x28] sm:$0xf]
    %v54 = vld [vmem:[#allocation5 + $0x2c] sm:$0xf]
    %v55 = vld [vmem:[#allocation5 + $0x30] sm:$0xf]
    %v56 = vld [vmem:[#allocation5 + $0x34] sm:$0xf]
    %v57 = vld [vmem:[#allocation5 + $0x38] sm:$0xf]
    %v58 = vld [vmem:[#allocation5 + $0x3c] sm:$0xf]
    %v59 = vld [vmem:[%s2] sm:$0x1]
    %v61 = vlaneseq
    %v62 = vshrl.u32 %v61, 7
    %v63 = vsub.s32 0, %v62
    %v64 = vrot.slane %v59, %v63
    %v82 = vunpack.c.l.b16 %v43
    %v83 = vunpack.c.l.b16 %v44
    %v84 = vunpack.c.l.b16 %v45
    %v85 = vunpack.c.l.b16 %v46
    %v86 = vunpack.c.l.b16 %v47
    %v87 = vunpack.c.l.b16 %v48
    %v88 = vunpack.c.l.b16 %v49
    %v89 = vunpack.c.l.b16 %v50
    %v90 = vunpack.c.l.b16 %v51
    %v91 = vunpack.c.l.b16 %v52
    %v92 = vunpack.c.l.b16 %v53
    %v93 = vunpack.c.l.b16 %v54
    %v94 = vunpack.c.l.b16 %v55
    %v95 = vunpack.c.l.b16 %v56
    %v96 = vunpack.c.l.b16 %v57
    %v97 = vunpack.c.l.b16 %v58
    %v98 = vpack.c.b16 %v83, %v82
    %v99 = vpack.c.b16 %v85, %v84
    %v100 = vpack.c.b16 %v87, %v86
    %v101 = vpack.c.b16 %v89, %v88
    %v102 = vpack.c.b16 %v91, %v90
    %v103 = vpack.c.b16 %v93, %v92
    %v104 = vpack.c.b16 %v95, %v94
    %v105 = vpack.c.b16 %v97, %v96
    %114 = vmatprep.subr.bf16.mxu0 0
    %115 = vmatpush1.bf16.msra.mxu0 %v105
    %116 = vmatprep.subr.bf16.mxu0 0
    %117 = vmatpush1.bf16.msra.mxu0 %v104
    %118 = vmatprep.subr.bf16.mxu0 0
    %119 = vmatpush1.bf16.msra.mxu0 %v103
    %120 = vmatprep.subr.bf16.mxu0 0
    %121 = vmatpush1.bf16.msra.mxu0 %v102
    %122 = vmatprep.subr.bf16.mxu0 0
    %123 = vmatpush1.bf16.msra.mxu0 %v101
    %124 = vmatprep.subr.bf16.mxu0 0
    %125 = vmatpush1.bf16.msra.mxu0 %v100
    %126 = vmatprep.subr.bf16.mxu0 0
    %127 = vmatpush1.bf16.msra.mxu0 %v99
    %128 = vmatprep.subr.bf16.mxu0 0
    %129 = vmatpush1.bf16.msra.mxu0 %v98
    %130 = vmatprep.subr.bf16.mxu0 0
    %131 = vmatpush2.bf16.msra.mxu0 0
    %132 = vmatprep.subr.bf16.mxu0 0
    %133 = vmatpush2.bf16.msra.mxu0 0
    %134 = vmatprep.subr.bf16.mxu0 0
    %135 = vmatpush2.bf16.msra.mxu0 0
    %136 = vmatprep.subr.bf16.mxu0 0
    %137 = vmatpush2.bf16.msra.mxu0 0
    %138 = vmatprep.subr.bf16.mxu0 0
    %139 = vmatpush2.bf16.msra.mxu0 0
    %140 = vmatprep.subr.bf16.mxu0 0
    %141 = vmatpush2.bf16.msra.mxu0 0
    %142 = vmatprep.subr.bf16.mxu0 0
    %143 = vmatpush2.bf16.msra.mxu0 0
    %144 = vmatprep.subr.bf16.mxu0 0
    %145 = vmatpush2.bf16.msra.mxu0 0
    %146 = vmatprep.mubr.bf16.mxu0 0
    %147 = vmatmul.mubr.bf16.gmra.mxu0 %v42
    %v148 = vpop.f32.mrf.mxu0
    %v149 = vadd.f32 %v64, %v148
    %v150 = vpop.f32.mrf.mxu0
    %v151 = vpop.f32.mrf.mxu0
    %v152 = vpop.f32.mrf.mxu0
    %153 = vdwg.mxu0
    %154 = vst [vmem:[#allocation7] sm:$0xff] %v149
    // Predicated region
    $region22: #{tpu_custom_call.1} parent=1 // pred_check
      _
    $region23: #{tpu_custom_call.1} parent=1 // pred_check_branch
      %156 = sbr.rel (0) target = $region25
    $region24: #{tpu_custom_call.1} parent=1 // pred_region
      %s158 = ssub.s32 128, 128
      %159 = vsyncadd [#allocation4], %s158
      %s161 = sshll.u32 [#allocation7], 4
      %s162 = int_to_ptr.vmem [resolvable:$true] %s161
      %164 = dma.vmem_to_hbm [thread:$0]  %s162, 128, %s3, [#allocation4]
    $region25: #{tpu_custom_call.1} parent=1 // pred_fallthru
      _
    // Predicated region
    $region26: #{tpu_custom_call.1} parent=1 // pred_check
      _
    $region27: #{tpu_custom_call.1} parent=1 // pred_check_branch
      %166 = sbr.rel (0) target = $region29
    $region28: #{tpu_custom_call.1} parent=1 // pred_region
      %167 = dma.done [#allocation4], 128
    $region29: #{tpu_custom_call.1} parent=1 // pred_fallthru
      _
    %168 = vsyncpa [#allocation3], 1
    %169 = vsyncpa [#allocation6], 1
    %170 = vsyncpa [#allocation4], 1

</llo_original>
